<compile_context>
chip_gen: v6e
topology: v6e:2x2x1
jax: 0.10.0
libtpu: 0.0.40
codegen_flags: <defaults>
</compile_context>

<pallas_src>
import functools

import jax
import jax.numpy as jnp
from jax.experimental import pallas as pl
from jax.experimental.pallas import tpu as pltpu

LANE = 128      # vreg lane width: feature dims padded to multiples of this
SUBLANE = 8     # f32 sublane tile: node counts padded to multiples of this


def _round_up(x, m):
    return (x + m - 1) // m * m


def _pad2d(x, rows, cols):
    r, c = x.shape
    if r == rows and c == cols:
        return x
    return jnp.pad(x, ((0, rows - r), (0, cols - c)))


# ---------------------------------------------------------------------------
# Pallas kernels
# ---------------------------------------------------------------------------
def _linear_kernel(x_ref, w_ref, b_ref, o_ref, *, apply_relu):
    # y = x @ w + b (+ optional relu); bf16 operands, f32 accumulation.
    y = jnp.dot(x_ref[...], w_ref[...], preferred_element_type=jnp.float32)
    y = y + b_ref[...]
    if apply_relu:
        y = jnp.maximum(y, 0.0)
    o_ref[...] = y.astype(o_ref.dtype)


def _linear_relu_matmul_kernel(x_ref, w_ref, b_ref, w2_ref, o_ref):
    # o = (relu(x @ w + b)) @ w2  -- encoder fused with first conv's XW.
    h = jnp.dot(x_ref[...], w_ref[...], preferred_element_type=jnp.float32)
    h = jnp.maximum(h + b_ref[...], 0.0)
    o_ref[...] = jnp.dot(h.astype(jnp.bfloat16), w2_ref[...],
                         preferred_element_type=jnp.float32).astype(o_ref.dtype)


def _spmm_fused_kernel(a_ref, xw_ref, b_ref, wn_ref, bn_ref, o_ref, acc_ref, *,
                       tk):
    # One GCN layer, tiled over (rows, contraction):
    #   acc += A[i, k] @ XW[k]                     (XW fully VMEM-resident)
    #   epilogue: H = relu(acc + b); o = bf16(H) @ W_next + b_next
    k = pl.program_id(1)

    @pl.when(k == 0)
    def _():
        acc_ref[...] = jnp.zeros_like(acc_ref)

    off = pl.multiple_of(k * tk, tk)
    acc_ref[...] += jnp.dot(a_ref[...], xw_ref[pl.ds(off, tk), :],
                            preferred_element_type=jnp.float32)

    @pl.when(k == pl.num_programs(1) - 1)
    def _():
        h = jnp.maximum(acc_ref[...] + b_ref[...], 0.0)
        y = jnp.dot(h.astype(jnp.bfloat16), wn_ref[...],
                    preferred_element_type=jnp.float32)
        o_ref[...] = (y + bn_ref[...]).astype(o_ref.dtype)


def _fused_forward_kernel(a_ref, x_ref, enc_w_ref, enc_b_ref, cw_ref, cb_ref,
                          dec_w_ref, dec_b_ref, o_ref, *, nlayers):
    # Whole forward in one kernel (small graphs); H stays on-chip between layers.
    h = jnp.dot(x_ref[...], enc_w_ref[...], preferred_element_type=jnp.float32)
    h = jnp.maximum(h + enc_b_ref[...], 0.0)
    a = a_ref[...]                                        # bf16 [Np, Np]
    for l in range(nlayers):                              # static unroll
        xw = jnp.dot(h.astype(jnp.bfloat16), cw_ref[l],
                     preferred_element_type=jnp.float32)
        ax = jnp.dot(a, xw.astype(jnp.bfloat16),
                     preferred_element_type=jnp.float32)
        h = jnp.maximum(ax + cb_ref[l], 0.0)
    y = jnp.dot(h.astype(jnp.bfloat16), dec_w_ref[...],
                preferred_element_type=jnp.float32)
    o_ref[...] = (y + dec_b_ref[...]).astype(o_ref.dtype)


# ---------------------------------------------------------------------------
# pallas_call wrappers
# ---------------------------------------------------------------------------
def _row_block(n):
    for cand in (1024, 512, 256):
        if n % cand == 0:
            return cand
    return n


def pallas_linear(x, w, b, *, apply_relu, out_dtype):
    """x: [N, Fin] bf16, w: [Fin, Fout] bf16 (pre-transposed, lane-padded), b f32."""
    n, fin = x.shape
    fout = w.shape[1]
    bm = _row_block(n)
    cost = pl.CostEstimate(
        flops=2 * n * fin * fout, transcendentals=0,
        bytes_accessed=2 * (n * fin + fin * fout) + 4 * fout
        + jnp.dtype(out_dtype).itemsize * n * fout)
    return pl.pallas_call(
        functools.partial(_linear_kernel, apply_relu=apply_relu),
        out_shape=jax.ShapeDtypeStruct((n, fout), out_dtype),
        grid=(n // bm,),
        in_specs=[pl.BlockSpec((bm, fin), lambda i: (i, 0)),
                  pl.BlockSpec((fin, fout), lambda i: (0, 0)),
                  pl.BlockSpec((1, fout), lambda i: (0, 0))],
        out_specs=pl.BlockSpec((bm, fout), lambda i: (i, 0)),
        compiler_params=pltpu.CompilerParams(dimension_semantics=("parallel",)),
        cost_estimate=cost,
    )(x, w, b)


def pallas_linear_relu_matmul(x, w, b, w2):
    """(relu(x @ w + b)) @ w2  -> bf16.  Encoder fused with first conv's XW."""
    n, fin = x.shape
    hid = w.shape[1]
    fout = w2.shape[1]
    bm = _row_block(n)
    cost = pl.CostEstimate(
        flops=2 * n * fin * hid + 2 * n * hid * fout, transcendentals=0,
        bytes_accessed=2 * (n * fin + fin * hid + hid * fout + n * fout) + 4 * hid)
    return pl.pallas_call(
        _linear_relu_matmul_kernel,
        out_shape=jax.ShapeDtypeStruct((n, fout), jnp.bfloat16),
        grid=(n // bm,),
        in_specs=[pl.BlockSpec((bm, fin), lambda i: (i, 0)),
                  pl.BlockSpec((fin, hid), lambda i: (0, 0)),
                  pl.BlockSpec((1, hid), lambda i: (0, 0)),
                  pl.BlockSpec((hid, fout), lambda i: (0, 0))],
        out_specs=pl.BlockSpec((bm, fout), lambda i: (i, 0)),
        compiler_params=pltpu.CompilerParams(dimension_semantics=("parallel",)),
        cost_estimate=cost,
    )(x, w, b, w2)


def pallas_gcn_propagate_fused(a_bf16, xw_bf16, b, w_next, b_next, *, out_dtype):
    """out = (relu(A_hat @ XW + b)) @ W_next + b_next, tiled over rows and the
    contraction (neighbor) axis.

    a_bf16: [N, N] bf16; xw_bf16: [N, Hp] bf16 (kept fully VMEM-resident);
    b: [1, Hp] f32; w_next: [Hp, Fn] bf16; b_next: [1, Fn] f32.
    """
    n = a_bf16.shape[0]
    hp = xw_bf16.shape[1]
    fn = w_next.shape[1]

    tk = n                                   # contraction tile (cols of A)
    for cand in (2048, 1024, 512, 256):
        if n % cand == 0:
            tk = cand
            break
    tm = n                                   # row tile
    for cand in (512, 256):                  # <=512 fits v5e's 16 MiB scoped VMEM
        if n % cand == 0 and n // cand >= 2:  # >=2 row blocks -> both v7x TCs busy
            tm = cand
            break
    grid = (n // tm, n // tk)

    cost = pl.CostEstimate(
        flops=2 * n * n * hp + 2 * n * hp * fn, transcendentals=0,
        bytes_accessed=2 * n * n + 2 * n * hp + 2 * hp * fn + 4 * (hp + fn)
        + jnp.dtype(out_dtype).itemsize * n * fn)

    return pl.pallas_call(
        functools.partial(_spmm_fused_kernel, tk=tk),
        out_shape=jax.ShapeDtypeStruct((n, fn), out_dtype),
        grid_spec=pltpu.PrefetchScalarGridSpec(
            num_scalar_prefetch=0,
            grid=grid,
            in_specs=[pl.BlockSpec((tm, tk), lambda i, k: (i, k)),     # A tile
                      pl.BlockSpec((n, hp), lambda i, k: (0, 0)),      # XW resident
                      pl.BlockSpec((1, hp), lambda i, k: (0, 0)),      # conv bias
                      pl.BlockSpec((hp, fn), lambda i, k: (0, 0)),     # W_next
                      pl.BlockSpec((1, fn), lambda i, k: (0, 0))],     # next bias
            out_specs=pl.BlockSpec((tm, fn), lambda i, k: (i, 0)),
            scratch_shapes=[pltpu.VMEM((tm, hp), jnp.float32)]),
        compiler_params=pltpu.CompilerParams(
            dimension_semantics=("parallel", "arbitrary")),  # row axis -> 2 TCs
        cost_estimate=cost,
    )(a_bf16, xw_bf16, b, w_next, b_next)


def pallas_fused_forward(a_bf16, x_p, enc_w, enc_b, cw, cb, dec_w, dec_b, nlayers):
    """Whole forward in one pallas_call (small graphs only; footprint-gated)."""
    n = x_p.shape[0]
    fp, hp = enc_w.shape
    cp = dec_w.shape[1]
    flops = (2 * n * fp * hp
             + nlayers * (2 * n * hp * hp + 2 * n * n * hp)
             + 2 * n * hp * cp)
    bytes_accessed = (2 * n * n
                      + 2 * (n * fp + fp * hp + nlayers * hp * hp + hp * cp)
                      + 4 * (n * cp + (1 + nlayers) * hp + cp))
    cost = pl.CostEstimate(flops=flops, transcendentals=0,
                           bytes_accessed=bytes_accessed)
    return pl.pallas_call(
        functools.partial(_fused_forward_kernel, nlayers=nlayers),
        out_shape=jax.ShapeDtypeStruct((n, cp), jnp.float32),
        grid=(1,),
        in_specs=[
            pl.BlockSpec((n, n), lambda i: (0, 0)),                # A_hat (bf16)
            pl.BlockSpec((n, fp), lambda i: (0, 0)),               # X (bf16)
            pl.BlockSpec((fp, hp), lambda i: (0, 0)),              # enc W
            pl.BlockSpec((1, hp), lambda i: (0, 0)),               # enc b
            pl.BlockSpec((nlayers, hp, hp), lambda i: (0, 0, 0)),  # conv Ws
            pl.BlockSpec((nlayers, 1, hp), lambda i: (0, 0, 0)),   # conv bs
            pl.BlockSpec((hp, cp), lambda i: (0, 0)),              # dec W
            pl.BlockSpec((1, cp), lambda i: (0, 0)),               # dec b
        ],
        out_specs=pl.BlockSpec((n, cp), lambda i: (0, 0)),
        compiler_params=pltpu.CompilerParams(vmem_limit_bytes=48 << 20),
        cost_estimate=cost,
    )(a_bf16, x_p, enc_w, enc_b, cw, cb, dec_w, dec_b)


# ---------------------------------------------------------------------------
# Glue: normalized adjacency, parameter init/padding, full forward, reference
# ---------------------------------------------------------------------------
def build_gcn_norm_adj(edge_index, n_nodes):
    """Dense D^{-1/2}(A + I)D^{-1/2} from edge_index [2, E] (PyG gcn_norm defaults)."""
    src, dst = edge_index[0], edge_index[1]
    w = jnp.where(src == dst, 0.0, 1.0).astype(jnp.float32)
    adj = jnp.zeros((n_nodes, n_nodes), jnp.float32).at[dst, src].add(w)
    adj = adj + jnp.eye(n_nodes, dtype=jnp.float32)
    deg = jnp.sum(adj, axis=1)
    dinv = jnp.where(deg > 0, 1.0 / jnp.sqrt(deg), 0.0)
    return dinv[:, None] * adj * dinv[None, :]


def init_linear_params(key, fan_in, fan_out):
    """PyTorch nn.Linear-style uniform init; weight stored as [fan_in, fan_out]."""
    kw, kb = jax.random.split(key)
    bound = 1.0 / jnp.sqrt(jnp.float32(fan_in))
    w = jax.random.uniform(kw, (fan_in, fan_out), jnp.float32, -bound, bound)
    b = jax.random.uniform(kb, (1, fan_out), jnp.float32, -bound, bound)
    return w, b


def prepare_params(params):
    """Zero-pad feature dims to multiples of 128; weights -> bf16, biases f32."""
    def pad_wb(w, b):
        fi, fo = w.shape
        wp = _pad2d(w, _round_up(fi, LANE), _round_up(fo, LANE)).astype(jnp.bfloat16)
        bp = _pad2d(b, 1, _round_up(fo, LANE))
        return wp, bp
    return {"enc": pad_wb(*params["enc"]),
            "convs": [pad_wb(w, b) for (w, b) in params["convs"]],
            "dec": pad_wb(*params["dec"])}


def _fused_vmem_bytes(n, fp, hp, cp, nlayers):
    """Rough double-buffered VMEM footprint of the fully-fused small-graph path."""
    io = (n * n * 2 + n * fp * 2 + fp * hp * 2 + nlayers * hp * hp * 2
          + hp * cp * 2 + 4 * ((1 + nlayers) * hp + cp) + n * cp * 4)
    interm = 3 * n * hp * 4                       # h / xw / ax working values
    return 2 * io + interm


def plain_gnn_forward(x, a_hat, params, *, mode="auto", fuse_max_nodes=512):
    """Forward of plain_GNN (conv_type='GCN', dropout rates 0)."""
    n, _ = x.shape
    nclass = params["dec"][0].shape[1]
    pp = prepare_params(params)
    enc_w, enc_b = pp["enc"]
    dec_w, dec_b = pp["dec"]
    convs = pp["convs"]
    nlayers = len(convs)
    fp, hp = enc_w.shape
    cp = dec_w.shape[1]

    if mode == "auto":
        fits = _fused_vmem_bytes(_round_up(n, SUBLANE), fp, hp, cp,
                                 nlayers) <= (32 << 20)
        mode = "fused" if (n <= fuse_max_nodes and nlayers > 0 and fits) else "tiled"

    if mode == "fused" and nlayers > 0:
        n_pad = _round_up(n, SUBLANE)
        x_p = _pad2d(x, n_pad, fp).astype(jnp.bfloat16)
        a_p = _pad2d(a_hat, n_pad, n_pad).astype(jnp.bfloat16)
        cw = jnp.stack([w for (w, _) in convs])          # [L, Hp, Hp] bf16
        cb = jnp.stack([b for (_, b) in convs])          # [L, 1, Hp] f32
        out_p = pallas_fused_forward(a_p, x_p, enc_w, enc_b, cw, cb,
                                     dec_w, dec_b, nlayers)
        return out_p[:n, :nclass]

    # ---- Tiled path: per-layer propagate with fused next-XW epilogue -------
    n_pad = _round_up(n, 256)                 # divisible by the A row/col tiles
    x_p = _pad2d(x, n_pad, fp).astype(jnp.bfloat16)
    a_p = _pad2d(a_hat, n_pad, n_pad).astype(jnp.bfloat16)

    if nlayers == 0:
        h = pallas_linear(x_p, enc_w, enc_b, apply_relu=True,
                          out_dtype=jnp.bfloat16)
        out_p = pallas_linear(h, dec_w, dec_b, apply_relu=False,
                              out_dtype=jnp.float32)
        return out_p[:n, :nclass]

    zero_h = jnp.zeros((1, hp), jnp.float32)
    # Encoder (+relu) fused with the first conv's XW -> bf16 [Np, Hp].
    xw = pallas_linear_relu_matmul(x_p, enc_w, enc_b, convs[0][0])
    for l in range(nlayers):
        b_l = convs[l][1]
        if l < nlayers - 1:
            w_next, b_next, out_dtype = convs[l + 1][0], zero_h, jnp.bfloat16
        else:
            w_next, b_next, out_dtype = dec_w, dec_b, jnp.float32
        xw = pallas_gcn_propagate_fused(a_p, xw, b_l, w_next, b_next,
                                        out_dtype=out_dtype)
    return xw[:n, :nclass]                    # last iter produced dec output


def reference_forward(x, a_hat, params):
    """Pure-JAX reference emulating the kernels' bf16 operand storage."""
    bf = lambda t: t.astype(jnp.bfloat16).astype(jnp.float32)
    a = bf(a_hat)
    enc_w, enc_b = params["enc"]
    dec_w, dec_b = params["dec"]
    h = jnp.maximum(bf(x) @ bf(enc_w) + enc_b, 0.0)
    for (w, b) in params["convs"]:
        xw = bf(bf(h) @ bf(w))
        h = jnp.maximum(a @ xw + b, 0.0)
    return bf(h) @ bf(dec_w) + dec_b


if __name__ == "__main__":
    key = jax.random.PRNGKey(0)
    k_x, k_enc, k_dec, k_convs, k_big = jax.random.split(key, 5)

    # ----- Test 1: toy problem (exercises the fused single-kernel path) -----
    N1, NFEAT1, NHID1, NCLASS1, NLAYERS1 = 16, 8, 32, 4, 2
    x1 = jax.random.normal(k_x, (N1, NFEAT1), jnp.float32)
    idx = jnp.arange(N1)
    src = jnp.concatenate([idx, (idx + 1) % N1])
    dst = jnp.concatenate([(idx + 1) % N1, idx])
    edge_index1 = jnp.stack([src, dst], axis=0)
    a_hat1 = build_gcn_norm_adj(edge_index1, N1)

    conv_keys = jax.random.split(k_convs, NLAYERS1)
    params1 = {
        "enc": init_linear_params(k_enc, NFEAT1, NHID1),
        "convs": [init_linear_params(conv_keys[i], NHID1, NHID1)
                  for i in range(NLAYERS1)],
        "dec": init_linear_params(k_dec, NHID1, NCLASS1),
    }

    out1 = jax.block_until_ready(plain_gnn_forward(x1, a_hat1, params1))
    ref1 = reference_forward(x1, a_hat1, params1)
    assert out1.shape == (N1, NCLASS1)
    assert jnp.allclose(out1, ref1, atol=2e-2, rtol=2e-2), \
        float(jnp.max(jnp.abs(out1 - ref1)))

    # ----- Test 2: larger graph (exercises the tiled fused-epilogue path) ---
    N2, NFEAT2, NHID2, NCLASS2, NLAYERS2, E2 = 768, 64, 128, 16, 2, 6144
    kx2, ke2, kd2, kc2, ks2, kt2 = jax.random.split(k_big, 6)
    x2 = jax.random.normal(kx2, (N2, NFEAT2), jnp.float32)
    src2 = jax.random.randint(ks2, (E2,), 0, N2)
    dst2 = jax.random.randint(kt2, (E2,), 0, N2)
    edge_index2 = jnp.stack([src2, dst2], axis=0)   # multi-edges / self-loops
    a_hat2 = build_gcn_norm_adj(edge_index2, N2)

    conv_keys2 = jax.random.split(kc2, NLAYERS2)
    params2 = {
        "enc": init_linear_params(ke2, NFEAT2, NHID2),
        "convs": [init_linear_params(conv_keys2[i], NHID2, NHID2)
                  for i in range(NLAYERS2)],
        "dec": init_linear_params(kd2, NHID2, NCLASS2),
    }

    out2 = jax.block_until_ready(
        plain_gnn_forward(x2, a_hat2, params2, mode="tiled"))
    ref2 = reference_forward(x2, a_hat2, params2)
    assert out2.shape == (N2, NCLASS2)
    assert jnp.allclose(out2, ref2, atol=2e-2, rtol=2e-2), \
        float(jnp.max(jnp.abs(out2 - ref2)))

    print("KERNEL_OK")
</pallas_src>

<mosaic_0001>
module attributes {stable_mosaic.version = 11 : i64} {
  func.func @_fused_forward_kernel(%arg0: i32, %arg1: memref<16x16xbf16, #tpu.memory_space<vmem>>, %arg2: memref<16x128xbf16, #tpu.memory_space<vmem>>, %arg3: memref<128x128xbf16, #tpu.memory_space<vmem>>, %arg4: memref<1x128xf32, #tpu.memory_space<vmem>>, %arg5: memref<2x128x128xbf16, #tpu.memory_space<vmem>>, %arg6: memref<2x1x128xf32, #tpu.memory_space<vmem>>, %arg7: memref<128x128xbf16, #tpu.memory_space<vmem>>, %arg8: memref<1x128xf32, #tpu.memory_space<vmem>>, %arg9: memref<16x128xf32, #tpu.memory_space<vmem>>) attributes {dimension_semantics = [#tpu.dimension_semantics<arbitrary>], iteration_bounds = array<i64: 1>, scalar_prefetch = 0 : i64, scratch_operands = 0 : i64, tpu.core_type = #tpu.core_type<tc>, window_params = [{pipeline_mode = #tpu.pipeline_mode<synchronous>, transform_indices = @transform_0, window_bounds = array<i64: 16, 16>}, {pipeline_mode = #tpu.pipeline_mode<synchronous>, transform_indices = @transform_1, window_bounds = array<i64: 16, 128>}, {pipeline_mode = #tpu.pipeline_mode<synchronous>, transform_indices = @transform_2, window_bounds = array<i64: 128, 128>}, {pipeline_mode = #tpu.pipeline_mode<synchronous>, transform_indices = @transform_3, window_bounds = array<i64: 1, 128>}, {pipeline_mode = #tpu.pipeline_mode<synchronous>, transform_indices = @transform_4, window_bounds = array<i64: 2, 128, 128>}, {pipeline_mode = #tpu.pipeline_mode<synchronous>, transform_indices = @transform_5, window_bounds = array<i64: 2, 1, 128>}, {pipeline_mode = #tpu.pipeline_mode<synchronous>, transform_indices = @transform_6, window_bounds = array<i64: 128, 128>}, {pipeline_mode = #tpu.pipeline_mode<synchronous>, transform_indices = @transform_7, window_bounds = array<i64: 1, 128>}, {pipeline_mode = #tpu.pipeline_mode<synchronous>, transform_indices = @transform_8, window_bounds = array<i64: 16, 128>}]} {
    %c0 = arith.constant 0 : index
    %c0_0 = arith.constant 0 : index
    %0 = vector.load %arg2[%c0, %c0_0] : memref<16x128xbf16, #tpu.memory_space<vmem>>, vector<16x128xbf16>
    %c0_1 = arith.constant 0 : index
    %c0_2 = arith.constant 0 : index
    %1 = vector.load %arg3[%c0_1, %c0_2] : memref<128x128xbf16, #tpu.memory_space<vmem>>, vector<128x128xbf16>
    %cst = arith.constant dense<0.000000e+00> : vector<16x128xf32>
    %2 = tpu.matmul %0, %1, %cst {dimension_numbers = #tpu.dot_dimension_numbers<[1], [0], [0], [1], [0, 0, 1, 1], [], []>} : vector<16x128xbf16>, vector<128x128xbf16>, vector<16x128xf32> -> vector<16x128xf32>
    %c0_3 = arith.constant 0 : index
    %c0_4 = arith.constant 0 : index
    %3 = vector.load %arg4[%c0_3, %c0_4] : memref<1x128xf32, #tpu.memory_space<vmem>>, vector<1x128xf32>
    %4 = vector.broadcast %3 : vector<1x128xf32> to vector<16x128xf32>
    %5 = arith.addf %2, %4 : vector<16x128xf32>
    %cst_5 = arith.constant 0.000000e+00 : f32
    %6 = vector.broadcast %cst_5 : f32 to vector<16x128xf32>
    %7 = arith.maximumf %5, %6 : vector<16x128xf32>
    %c0_6 = arith.constant 0 : index
    %c0_7 = arith.constant 0 : index
    %8 = vector.load %arg1[%c0_6, %c0_7] : memref<16x16xbf16, #tpu.memory_space<vmem>>, vector<16x16xbf16>
    %9 = arith.truncf %7 : vector<16x128xf32> to vector<16x128xbf16>
    %c0_8 = arith.constant 0 : index
    %c0_9 = arith.constant 0 : index
    %c0_10 = arith.constant 0 : index
    %10 = vector.load %arg5[%c0_8, %c0_9, %c0_10] : memref<2x128x128xbf16, #tpu.memory_space<vmem>>, vector<1x128x128xbf16>
    %11 = vector.shape_cast %10 : vector<1x128x128xbf16> to vector<128x128xbf16>
    %cst_11 = arith.constant dense<0.000000e+00> : vector<16x128xf32>
    %12 = tpu.matmul %9, %11, %cst_11 {dimension_numbers = #tpu.dot_dimension_numbers<[1], [0], [0], [1], [0, 0, 1, 1], [], []>} : vector<16x128xbf16>, vector<128x128xbf16>, vector<16x128xf32> -> vector<16x128xf32>
    %13 = arith.truncf %12 : vector<16x128xf32> to vector<16x128xbf16>
    %cst_12 = arith.constant dense<0.000000e+00> : vector<16x128xf32>
    %14 = tpu.matmul %8, %13, %cst_12 {dimension_numbers = #tpu.dot_dimension_numbers<[1], [0], [0], [1], [0, 0, 1, 1], [], []>} : vector<16x16xbf16>, vector<16x128xbf16>, vector<16x128xf32> -> vector<16x128xf32>
    %c0_13 = arith.constant 0 : index
    %c0_14 = arith.constant 0 : index
    %c0_15 = arith.constant 0 : index
    %15 = vector.load %arg6[%c0_13, %c0_14, %c0_15] : memref<2x1x128xf32, #tpu.memory_space<vmem>>, vector<1x1x128xf32>
    %16 = vector.shape_cast %15 : vector<1x1x128xf32> to vector<1x128xf32>
    %17 = vector.broadcast %16 : vector<1x128xf32> to vector<16x128xf32>
    %18 = arith.addf %14, %17 : vector<16x128xf32>
    %cst_16 = arith.constant 0.000000e+00 : f32
    %19 = vector.broadcast %cst_16 : f32 to vector<16x128xf32>
    %20 = arith.maximumf %18, %19 : vector<16x128xf32>
    %21 = arith.truncf %20 : vector<16x128xf32> to vector<16x128xbf16>
    %c1 = arith.constant 1 : index
    %c0_17 = arith.constant 0 : index
    %c0_18 = arith.constant 0 : index
    %22 = vector.load %arg5[%c1, %c0_17, %c0_18] : memref<2x128x128xbf16, #tpu.memory_space<vmem>>, vector<1x128x128xbf16>
    %23 = vector.shape_cast %22 : vector<1x128x128xbf16> to vector<128x128xbf16>
    %cst_19 = arith.constant dense<0.000000e+00> : vector<16x128xf32>
    %24 = tpu.matmul %21, %23, %cst_19 {dimension_numbers = #tpu.dot_dimension_numbers<[1], [0], [0], [1], [0, 0, 1, 1], [], []>} : vector<16x128xbf16>, vector<128x128xbf16>, vector<16x128xf32> -> vector<16x128xf32>
    %25 = arith.truncf %24 : vector<16x128xf32> to vector<16x128xbf16>
    %cst_20 = arith.constant dense<0.000000e+00> : vector<16x128xf32>
    %26 = tpu.matmul %8, %25, %cst_20 {dimension_numbers = #tpu.dot_dimension_numbers<[1], [0], [0], [1], [0, 0, 1, 1], [], []>} : vector<16x16xbf16>, vector<16x128xbf16>, vector<16x128xf32> -> vector<16x128xf32>
    %c1_21 = arith.constant 1 : index
    %c0_22 = arith.constant 0 : index
    %c0_23 = arith.constant 0 : index
    %27 = vector.load %arg6[%c1_21, %c0_22, %c0_23] : memref<2x1x128xf32, #tpu.memory_space<vmem>>, vector<1x1x128xf32>
    %28 = vector.shape_cast %27 : vector<1x1x128xf32> to vector<1x128xf32>
    %29 = vector.broadcast %28 : vector<1x128xf32> to vector<16x128xf32>
    %30 = arith.addf %26, %29 : vector<16x128xf32>
    %cst_24 = arith.constant 0.000000e+00 : f32
    %31 = vector.broadcast %cst_24 : f32 to vector<16x128xf32>
    %32 = arith.maximumf %30, %31 : vector<16x128xf32>
    %33 = arith.truncf %32 : vector<16x128xf32> to vector<16x128xbf16>
    %c0_25 = arith.constant 0 : index
    %c0_26 = arith.constant 0 : index
    %34 = vector.load %arg7[%c0_25, %c0_26] : memref<128x128xbf16, #tpu.memory_space<vmem>>, vector<128x128xbf16>
    %cst_27 = arith.constant dense<0.000000e+00> : vector<16x128xf32>
    %35 = tpu.matmul %33, %34, %cst_27 {dimension_numbers = #tpu.dot_dimension_numbers<[1], [0], [0], [1], [0, 0, 1, 1], [], []>} : vector<16x128xbf16>, vector<128x128xbf16>, vector<16x128xf32> -> vector<16x128xf32>
    %c0_28 = arith.constant 0 : index
    %c0_29 = arith.constant 0 : index
    %36 = vector.load %arg8[%c0_28, %c0_29] : memref<1x128xf32, #tpu.memory_space<vmem>>, vector<1x128xf32>
    %37 = vector.broadcast %36 : vector<1x128xf32> to vector<16x128xf32>
    %38 = arith.addf %35, %37 : vector<16x128xf32>
    %c0_30 = arith.constant 0 : index
    %c0_31 = arith.constant 0 : index
    %39 = vector.load %arg9[%c0_30, %c0_31] : memref<16x128xf32, #tpu.memory_space<vmem>>, vector<16x128xf32>
    tpu.vector_store %arg9[%c0_30, %c0_31], %38 {strides = array<i32>} : memref<16x128xf32, #tpu.memory_space<vmem>>, vector<16x128xf32>,
    return
  }
  func.func @transform_0(%arg0: i32) -> (i32, i32) {
    %c0_i32 = arith.constant 0 : i32
    %c0_i32_0 = arith.constant 0 : i32
    %c0_i32_1 = arith.constant 0 : i32
    return %c0_i32, %c0_i32_0 : i32, i32
  }
  func.func @transform_1(%arg0: i32) -> (i32, i32) {
    %c0_i32 = arith.constant 0 : i32
    %c0_i32_0 = arith.constant 0 : i32
    %c0_i32_1 = arith.constant 0 : i32
    return %c0_i32, %c0_i32_0 : i32, i32
  }
  func.func @transform_2(%arg0: i32) -> (i32, i32) {
    %c0_i32 = arith.constant 0 : i32
    %c0_i32_0 = arith.constant 0 : i32
    %c0_i32_1 = arith.constant 0 : i32
    return %c0_i32, %c0_i32_0 : i32, i32
  }
  func.func @transform_3(%arg0: i32) -> (i32, i32) {
    %c0_i32 = arith.constant 0 : i32
    %c0_i32_0 = arith.constant 0 : i32
    %c0_i32_1 = arith.constant 0 : i32
    return %c0_i32, %c0_i32_0 : i32, i32
  }
  func.func @transform_4(%arg0: i32) -> (i32, i32, i32) {
    %c0_i32 = arith.constant 0 : i32
    %c0_i32_0 = arith.constant 0 : i32
    %c0_i32_1 = arith.constant 0 : i32
    %c0_i32_2 = arith.constant 0 : i32
    return %c0_i32, %c0_i32_0, %c0_i32_1 : i32, i32, i32
  }
  func.func @transform_5(%arg0: i32) -> (i32, i32, i32) {
    %c0_i32 = arith.constant 0 : i32
    %c0_i32_0 = arith.constant 0 : i32
    %c0_i32_1 = arith.constant 0 : i32
    %c0_i32_2 = arith.constant 0 : i32
    return %c0_i32, %c0_i32_0, %c0_i32_1 : i32, i32, i32
  }
  func.func @transform_6(%arg0: i32) -> (i32, i32) {
    %c0_i32 = arith.constant 0 : i32
    %c0_i32_0 = arith.constant 0 : i32
    %c0_i32_1 = arith.constant 0 : i32
    return %c0_i32, %c0_i32_0 : i32, i32
  }
  func.func @transform_7(%arg0: i32) -> (i32, i32) {
    %c0_i32 = arith.constant 0 : i32
    %c0_i32_0 = arith.constant 0 : i32
    %c0_i32_1 = arith.constant 0 : i32
    return %c0_i32, %c0_i32_0 : i32, i32
  }
  func.func @transform_8(%arg0: i32) -> (i32, i32) {
    %c0_i32 = arith.constant 0 : i32
    %c0_i32_0 = arith.constant 0 : i32
    %c0_i32_1 = arith.constant 0 : i32
    return %c0_i32, %c0_i32_0 : i32, i32
  }
}

</mosaic_0001>

<llo_original>
// kernel: tpu_custom_call.1
$region0: #{tpu_custom_call.1}
  #allocation0 [shape = 'u32[]', space=smem, size = 0x4, offset = 0x4, fixed_abs, tag = 'smem constant byte address 0x4 - core index']
  #allocation1 [shape = 'u32[144,128]{1,0:T(1,128)}', space=vmem, size = 0x12000, scoped, tag = 'internal scratch']
  %s0 = inlined_call_operand.hbm [shape: bf16[16,16], index: 0, kind: input, shape index: {}]
  %s1 = inlined_call_operand.hbm [shape: bf16[16,128], index: 1, kind: input, shape index: {}]
  %s2 = inlined_call_operand.hbm [shape: bf16[128,128], index: 2, kind: input, shape index: {}]
  %s3 = inlined_call_operand.vmem [shape: f32[1,128], index: 3, kind: input, shape index: {}]
  %s4 = inlined_call_operand.hbm [shape: bf16[2,128,128], index: 4, kind: input, shape index: {}]
  %s5 = inlined_call_operand.vmem [shape: f32[2,1,128], index: 5, kind: input, shape index: {}]
  %s6 = inlined_call_operand.hbm [shape: bf16[128,128], index: 6, kind: input, shape index: {}]
  %s7 = inlined_call_operand.vmem [shape: f32[1,128], index: 7, kind: input, shape index: {}]
  %s8 = inlined_call_operand.hbm [shape: f32[16,128], index: 8, kind: output, shape index: {}]
  %s9 = sld [smem:[#allocation0]]
  $region62: #{tpu_custom_call.1} parent=0
    _
  %s11 = ssub.s32 1, %s9
  %s12 = scalar_select 0, %s11, %s9
  $region1: #{tpu_custom_call.1} parent=0
    #allocation2 [shape = 'u8[4096]{0}', space=vmem, size = 0x1000, scoped, tag = 'input window, operand 0, single buffered']
    #allocation3 [shape = 's32[1]{0}', space=sflag, size = 0x4, scoped, tag = 'scoped memory for tpu_custom_call.1']
    #allocation4 [shape = 's32[1]{0}', space=sflag, size = 0x4, scoped, tag = 'scoped memory for tpu_custom_call.1']
    #allocation5 [shape = 'u8[4096]{0}', space=vmem, size = 0x1000, scoped, tag = 'input window, operand 1, single buffered']
    #allocation6 [shape = 's32[1]{0}', space=sflag, size = 0x4, scoped, tag = 'scoped memory for tpu_custom_call.1']
    #allocation7 [shape = 'u8[32768]{0}', space=vmem, size = 0x8000, scoped, tag = 'input window, operand 2, single buffered']
    #allocation8 [shape = 'u8[65536]{0}', space=vmem, size = 0x10000, scoped, tag = 'input window, operand 4, single buffered']
    #allocation9 [shape = 's32[1]{0}', space=sflag, size = 0x4, scoped, tag = 'scoped memory for tpu_custom_call.1']
    #allocation10 [shape = 'u8[32768]{0}', space=vmem, size = 0x8000, scoped, tag = 'input window, operand 6, single buffered']
    #allocation11 [shape = 'u8[8192]{0}', space=vmem, size = 0x2000, scoped, tag = 'output window, operand 0, single buffered']
    %13 = vsyncpa [#allocation3], 0
    %14 = vsyncpa [#allocation6], 0
    %15 = vsyncpa [#allocation9], 0
    %16 = vsyncpa [#allocation4], 0
    // Predicated region
    $region2: #{tpu_custom_call.1} parent=1 // pred_check
      _
    $region3: #{tpu_custom_call.1} parent=1 // pred_check_branch
      %18 = sbr.rel (0) target = $region5
    $region4: #{tpu_custom_call.1} parent=1 // pred_region
      %s20 = ssub.s32 128, 128
      %21 = vsyncadd [#allocation3], %s20
      %s22 = sshll.u32 [#allocation2], 4
      %s23 = int_to_ptr.vmem [resolvable:$true] %s22
      %28 = dma.hbm_to_vmem [thread:$0]  %s0, 128, %s23, [#allocation3], 64, 64, 4
    $region5: #{tpu_custom_call.1} parent=1 // pred_fallthru
      _
    // Predicated region
    $region6: #{tpu_custom_call.1} parent=1 // pred_check
      _
    $region7: #{tpu_custom_call.1} parent=1 // pred_check_branch
      %30 = sbr.rel (0) target = $region9
    $region8: #{tpu_custom_call.1} parent=1 // pred_region
      %s32 = ssub.s32 128, 128
      %33 = vsyncadd [#allocation6], %s32
      %s34 = sshll.u32 [#allocation5], 4
      %s35 = int_to_ptr.vmem [resolvable:$true] %s34
      %40 = dma.hbm_to_vmem [thread:$0]  %s1, 128, %s35, [#allocation6], 64, 64, 4
    $region9: #{tpu_custom_call.1} parent=1 // pred_fallthru
      _
    // Predicated region
    $region10: #{tpu_custom_call.1} parent=1 // pred_check
      _
    $region11: #{tpu_custom_call.1} parent=1 // pred_check_branch
      %42 = sbr.rel (0) target = $region13
    $region12: #{tpu_custom_call.1} parent=1 // pred_region
      %s44 = ssub.s32 1024, 1024
      %45 = vsyncadd [#allocation6], %s44
      %s46 = sshll.u32 [#allocation7], 4
      %s47 = int_to_ptr.vmem [resolvable:$true] %s46
      %52 = dma.hbm_to_vmem [thread:$0]  %s2, 1024, %s47, [#allocation6], 64, 64, 4
    $region13: #{tpu_custom_call.1} parent=1 // pred_fallthru
      _
    // Predicated region
    $region14: #{tpu_custom_call.1} parent=1 // pred_check
      _
    $region15: #{tpu_custom_call.1} parent=1 // pred_check_branch
      %54 = sbr.rel (0) target = $region17
    $region16: #{tpu_custom_call.1} parent=1 // pred_region
      _
    $region17: #{tpu_custom_call.1} parent=1 // pred_fallthru
      _
    // Predicated region
    $region18: #{tpu_custom_call.1} parent=1 // pred_check
      _
    $region19: #{tpu_custom_call.1} parent=1 // pred_check_branch
      %56 = sbr.rel (0) target = $region21
    $region20: #{tpu_custom_call.1} parent=1 // pred_region
      %s58 = ssub.s32 2048, 2048
      %59 = vsyncadd [#allocation9], %s58
      %s60 = sshll.u32 [#allocation8], 4
      %s61 = int_to_ptr.vmem [resolvable:$true] %s60
      %66 = dma.hbm_to_vmem [thread:$0]  %s4, 2048, %s61, [#allocation9], 64, 64, 4
    $region21: #{tpu_custom_call.1} parent=1 // pred_fallthru
      _
    // Predicated region
    $region22: #{tpu_custom_call.1} parent=1 // pred_check
      _
    $region23: #{tpu_custom_call.1} parent=1 // pred_check_branch
      %68 = sbr.rel (0) target = $region25
    $region24: #{tpu_custom_call.1} parent=1 // pred_region
      _
    $region25: #{tpu_custom_call.1} parent=1 // pred_fallthru
      _
    // Predicated region
    $region26: #{tpu_custom_call.1} parent=1 // pred_check
      _
    $region27: #{tpu_custom_call.1} parent=1 // pred_check_branch
      %70 = sbr.rel (0) target = $region29
    $region28: #{tpu_custom_call.1} parent=1 // pred_region
      %s72 = ssub.s32 1024, 1024
      %73 = vsyncadd [#allocation9], %s72
      %s74 = sshll.u32 [#allocation10], 4
      %s75 = int_to_ptr.vmem [resolvable:$true] %s74
      %80 = dma.hbm_to_vmem [thread:$0]  %s6, 1024, %s75, [#allocation9], 64, 64, 4
    $region29: #{tpu_custom_call.1} parent=1 // pred_fallthru
      _
    // Predicated region
    $region30: #{tpu_custom_call.1} parent=1 // pred_check
      _
    $region31: #{tpu_custom_call.1} parent=1 // pred_check_branch
      %82 = sbr.rel (0) target = $region33
    $region32: #{tpu_custom_call.1} parent=1 // pred_region
      _
    $region33: #{tpu_custom_call.1} parent=1 // pred_fallthru
      _
    // Predicated region
    $region34: #{tpu_custom_call.1} parent=1 // pred_check
      _
    $region35: #{tpu_custom_call.1} parent=1 // pred_check_branch
      %84 = sbr.rel (0) target = $region37
    $region36: #{tpu_custom_call.1} parent=1 // pred_region
      %85 = dma.done [#allocation3], 128
    $region37: #{tpu_custom_call.1} parent=1 // pred_fallthru
      _
    // Predicated region
    $region38: #{tpu_custom_call.1} parent=1 // pred_check
      _
    $region39: #{tpu_custom_call.1} parent=1 // pred_check_branch
      %87 = sbr.rel (0) target = $region41
    $region40: #{tpu_custom_call.1} parent=1 // pred_region
      %88 = dma.done [#allocation6], 128
    $region41: #{tpu_custom_call.1} parent=1 // pred_fallthru
      _
    // Predicated region
    $region42: #{tpu_custom_call.1} parent=1 // pred_check
      _
    $region43: #{tpu_custom_call.1} parent=1 // pred_check_branch
      %90 = sbr.rel (0) target = $region45
    $region44: #{tpu_custom_call.1} parent=1 // pred_region
      %91 = dma.done [#allocation6], 1024
    $region45: #{tpu_custom_call.1} parent=1 // pred_fallthru
      _
    // Predicated region
    $region46: #{tpu_custom_call.1} parent=1 // pred_check
      _
    $region47: #{tpu_custom_call.1} parent=1 // pred_check_branch
      %93 = sbr.rel (0) target = $region49
    $region48: #{tpu_custom_call.1} parent=1 // pred_region
      %94 = dma.done [#allocation9], 2048
    $region49: #{tpu_custom_call.1} parent=1 // pred_fallthru
      _
    // Predicated region
    $region50: #{tpu_custom_call.1} parent=1 // pred_check
      _
    $region51: #{tpu_custom_call.1} parent=1 // pred_check_branch
      %96 = sbr.rel (0) target = $region53
    $region52: #{tpu_custom_call.1} parent=1 // pred_region
      %97 = dma.done [#allocation9], 1024
    $region53: #{tpu_custom_call.1} parent=1 // pred_fallthru
      _
    %v99 = vld [vmem:[#allocation5] sm:$0xf]
    %v100 = vld [vmem:[#allocation5 + $0x4] sm:$0xf]
    %v101 = vld [vmem:[#allocation7] sm:$0xf]
    %v102 = vld [vmem:[#allocation7 + $0x4] sm:$0xf]
    %v103 = vld [vmem:[#allocation7 + $0x8] sm:$0xf]
    %v104 = vld [vmem:[#allocation7 + $0xc] sm:$0xf]
    %v105 = vld [vmem:[#allocation7 + $0x10] sm:$0xf]
    %v106 = vld [vmem:[#allocation7 + $0x14] sm:$0xf]
    %v107 = vld [vmem:[#allocation7 + $0x18] sm:$0xf]
    %v108 = vld [vmem:[#allocation7 + $0x1c] sm:$0xf]
    %v109 = vld [vmem:[#allocation7 + $0x20] sm:$0xf]
    %v110 = vld [vmem:[#allocation7 + $0x24] sm:$0xf]
    %v111 = vld [vmem:[#allocation7 + $0x28] sm:$0xf]
    %v112 = vld [vmem:[#allocation7 + $0x2c] sm:$0xf]
    %v113 = vld [vmem:[#allocation7 + $0x30] sm:$0xf]
    %v114 = vld [vmem:[#allocation7 + $0x34] sm:$0xf]
    %v115 = vld [vmem:[#allocation7 + $0x38] sm:$0xf]
    %v116 = vld [vmem:[#allocation7 + $0x3c] sm:$0xf]
    %v117 = vld [vmem:[%s3] sm:$0x1]
    %v119 = vlaneseq
    %v120 = vshrl.u32 %v119, 7
    %v121 = vsub.s32 0, %v120
    %v122 = vrot.slane %v117, %v121
    %v126 = vunpack.c.l.b16 %v99
    %v127 = vunpack.c.l.b16 %v100
    %v128 = vpack.c.b16 %v127, %v126
    %v146 = vunpack.c.l.b16 %v101
    %v147 = vunpack.c.l.b16 %v102
    %v148 = vunpack.c.l.b16 %v103
    %v149 = vunpack.c.l.b16 %v104
    %v150 = vunpack.c.l.b16 %v105
    %v151 = vunpack.c.l.b16 %v106
    %v152 = vunpack.c.l.b16 %v107
    %v153 = vunpack.c.l.b16 %v108
    %v154 = vunpack.c.l.b16 %v109
    %v155 = vunpack.c.l.b16 %v110
    %v156 = vunpack.c.l.b16 %v111
    %v157 = vunpack.c.l.b16 %v112
    %v158 = vunpack.c.l.b16 %v113
    %v159 = vunpack.c.l.b16 %v114
    %v160 = vunpack.c.l.b16 %v115
    %v161 = vunpack.c.l.b16 %v116
    %v162 = vpack.c.b16 %v147, %v146
    %v163 = vpack.c.b16 %v149, %v148
    %v164 = vpack.c.b16 %v151, %v150
    %v165 = vpack.c.b16 %v153, %v152
    %v166 = vpack.c.b16 %v155, %v154
    %v167 = vpack.c.b16 %v157, %v156
    %v168 = vpack.c.b16 %v159, %v158
    %v169 = vpack.c.b16 %v161, %v160
    %178 = vmatprep.subr.bf16.mxu0 0
    %179 = vmatpush1.bf16.msra.mxu0 %v169
    %180 = vmatprep.subr.bf16.mxu0 0
    %181 = vmatpush1.bf16.msra.mxu0 %v168
    %182 = vmatprep.subr.bf16.mxu0 0
    %183 = vmatpush1.bf16.msra.mxu0 %v167
    %184 = vmatprep.subr.bf16.mxu0 0
    %185 = vmatpush1.bf16.msra.mxu0 %v166
    %186 = vmatprep.subr.bf16.mxu0 0
    %187 = vmatpush1.bf16.msra.mxu0 %v165
    %188 = vmatprep.subr.bf16.mxu0 0
    %189 = vmatpush1.bf16.msra.mxu0 %v164
    %190 = vmatprep.subr.bf16.mxu0 0
    %191 = vmatpush1.bf16.msra.mxu0 %v163
    %192 = vmatprep.subr.bf16.mxu0 0
    %193 = vmatpush1.bf16.msra.mxu0 %v162
    %194 = vmatprep.subr.bf16.mxu0 0
    %195 = vmatpush2.bf16.msra.mxu0 0
    %196 = vmatprep.subr.bf16.mxu0 0
    %197 = vmatpush2.bf16.msra.mxu0 0
    %198 = vmatprep.subr.bf16.mxu0 0
    %199 = vmatpush2.bf16.msra.mxu0 0
    %200 = vmatprep.subr.bf16.mxu0 0
    %201 = vmatpush2.bf16.msra.mxu0 0
    %202 = vmatprep.subr.bf16.mxu0 0
    %203 = vmatpush2.bf16.msra.mxu0 0
    %204 = vmatprep.subr.bf16.mxu0 0
    %205 = vmatpush2.bf16.msra.mxu0 0
    %206 = vmatprep.subr.bf16.mxu0 0
    %207 = vmatpush2.bf16.msra.mxu0 0
    %208 = vmatprep.subr.bf16.mxu0 0
    %209 = vmatpush2.bf16.msra.mxu0 0
    %210 = vmatprep.mubr.bf16.mxu0 0
    %211 = vmatmul.mubr.bf16.gmra.mxu0 %v128
    %v212 = vpop.f32.mrf.mxu0
    %v213 = vadd.f32 %v122, %v212
    %v214 = vpop.f32.mrf.mxu0
    %v215 = vpop.f32.mrf.mxu0
    %v216 = vadd.f32 %v122, %v215
    %v217 = vpop.f32.mrf.mxu0
    %218 = vdwg.mxu0
    %v219 = vmax.f32 %v213, 0.0
    %v220 = vmax.f32 %v216, 0.0
    %v221 = vld [vmem:[#allocation2] sm:$0xf]
    %v222 = vld [vmem:[#allocation2 + $0x4] sm:$0xf]
    %v223 = vpack.c.bf16 %v220, %v219
    %v224 = vld [vmem:[#allocation8] sm:$0xf]
    %v225 = vld [vmem:[#allocation8 + $0x4] sm:$0xf]
    %v226 = vld [vmem:[#allocation8 + $0x8] sm:$0xf]
    %v227 = vld [vmem:[#allocation8 + $0xc] sm:$0xf]
    %v228 = vld [vmem:[#allocation8 + $0x10] sm:$0xf]
    %v229 = vld [vmem:[#allocation8 + $0x14] sm:$0xf]
    %v230 = vld [vmem:[#allocation8 + $0x18] sm:$0xf]
    %v231 = vld [vmem:[#allocation8 + $0x1c] sm:$0xf]
    %v232 = vld [vmem:[#allocation8 + $0x20] sm:$0xf]
    %v233 = vld [vmem:[#allocation8 + $0x24] sm:$0xf]
    %v234 = vld [vmem:[#allocation8 + $0x28] sm:$0xf]
    %v235 = vld [vmem:[#allocation8 + $0x2c] sm:$0xf]
    %v236 = vld [vmem:[#allocation8 + $0x30] sm:$0xf]
    %v237 = vld [vmem:[#allocation8 + $0x34] sm:$0xf]
    %v238 = vld [vmem:[#allocation8 + $0x38] sm:$0xf]
    %v239 = vld [vmem:[#allocation8 + $0x3c] sm:$0xf]
    %v256 = vunpack.c.l.b16 %v224
    %v257 = vunpack.c.l.b16 %v225
    %v258 = vunpack.c.l.b16 %v226
    %v259 = vunpack.c.l.b16 %v227
    %v260 = vunpack.c.l.b16 %v228
    %v261 = vunpack.c.l.b16 %v229
    %v262 = vunpack.c.l.b16 %v230
    %v263 = vunpack.c.l.b16 %v231
    %v264 = vunpack.c.l.b16 %v232
    %v265 = vunpack.c.l.b16 %v233
    %v266 = vunpack.c.l.b16 %v234
    %v267 = vunpack.c.l.b16 %v235
    %v268 = vunpack.c.l.b16 %v236
    %v269 = vunpack.c.l.b16 %v237
    %v270 = vunpack.c.l.b16 %v238
    %v271 = vunpack.c.l.b16 %v239
    %v272 = vpack.c.b16 %v257, %v256
    %v273 = vpack.c.b16 %v259, %v258
    %v274 = vpack.c.b16 %v261, %v260
    %v275 = vpack.c.b16 %v263, %v262
    %v276 = vpack.c.b16 %v265, %v264
    %v277 = vpack.c.b16 %v267, %v266
    %v278 = vpack.c.b16 %v269, %v268
    %v279 = vpack.c.b16 %v271, %v270
    %288 = vmatprep.subr.bf16.mxu0 0
    %289 = vmatpush1.bf16.msra.mxu0 %v279
    %290 = vmatprep.subr.bf16.mxu0 0
    %291 = vmatpush1.bf16.msra.mxu0 %v278
    %292 = vmatprep.subr.bf16.mxu0 0
    %293 = vmatpush1.bf16.msra.mxu0 %v277
    %294 = vmatprep.subr.bf16.mxu0 0
    %295 = vmatpush1.bf16.msra.mxu0 %v276
    %296 = vmatprep.subr.bf16.mxu0 0
    %297 = vmatpush1.bf16.msra.mxu0 %v275
    %298 = vmatprep.subr.bf16.mxu0 0
    %299 = vmatpush1.bf16.msra.mxu0 %v274
    %300 = vmatprep.subr.bf16.mxu0 0
    %301 = vmatpush1.bf16.msra.mxu0 %v273
    %302 = vmatprep.subr.bf16.mxu0 0
    %303 = vmatpush1.bf16.msra.mxu0 %v272
    %304 = vmatprep.subr.bf16.mxu0 0
    %305 = vmatpush2.bf16.msra.mxu0 0
    %306 = vmatprep.subr.bf16.mxu0 0
    %307 = vmatpush2.bf16.msra.mxu0 0
    %308 = vmatprep.subr.bf16.mxu0 0
    %309 = vmatpush2.bf16.msra.mxu0 0
    %310 = vmatprep.subr.bf16.mxu0 0
    %311 = vmatpush2.bf16.msra.mxu0 0
    %312 = vmatprep.subr.bf16.mxu0 0
    %313 = vmatpush2.bf16.msra.mxu0 0
    %314 = vmatprep.subr.bf16.mxu0 0
    %315 = vmatpush2.bf16.msra.mxu0 0
    %316 = vmatprep.subr.bf16.mxu0 0
    %317 = vmatpush2.bf16.msra.mxu0 0
    %318 = vmatprep.subr.bf16.mxu0 0
    %319 = vmatpush2.bf16.msra.mxu0 0
    %320 = vmatprep.mubr.bf16.mxu0 0
    %321 = vmatmul.mubr.bf16.gmra.mxu0 %v223
    %v322 = vpop.f32.mrf.mxu0
    %v323 = vadd.f32 0.0, %v322
    %v324 = vpop.f32.mrf.mxu0
    %v325 = vpop.f32.mrf.mxu0
    %v326 = vadd.f32 0.0, %v325
    %v327 = vpop.f32.mrf.mxu0
    %328 = vdwg.mxu0
    %v329 = vpack.c.bf16 %v326, %v323
    %v330 = vld [vmem:[%s5] sm:$0x1]
    %v332 = vlaneseq
    %v333 = vshrl.u32 %v332, 7
    %v334 = vsub.s32 0, %v333
    %v335 = vrot.slane %v330, %v334
    %v339 = vunpack.c.l.b16 %v221
    %v340 = vunpack.c.l.b16 %v222
    %v341 = vpack.c.b16 %v340, %v339
    %vm342 = vcmask 130048
    %v344 = vsel %vm342, %v341, 0
    %346 = vmatprep.subr.bf16.mxu0 0
    %347 = vmatpush1.bf16.msra.mxu0 0
    %348 = vmatprep.subr.bf16.mxu0 0
    %349 = vmatpush1.bf16.msra.mxu0 0
    %350 = vmatprep.subr.bf16.mxu0 0
    %351 = vmatpush1.bf16.msra.mxu0 0
    %352 = vmatprep.subr.bf16.mxu0 0
    %353 = vmatpush1.bf16.msra.mxu0 0
    %354 = vmatprep.subr.bf16.mxu0 0
    %355 = vmatpush1.bf16.msra.mxu0 0
    %356 = vmatprep.subr.bf16.mxu0 0
    %357 = vmatpush1.bf16.msra.mxu0 0
    %358 = vmatprep.subr.bf16.mxu0 0
    %359 = vmatpush1.bf16.msra.mxu0 0
    %360 = vmatprep.subr.bf16.mxu0 0
    %361 = vmatpush1.bf16.msra.mxu0 %v329
    %362 = vmatprep.subr.bf16.mxu0 0
    %363 = vmatpush2.bf16.msra.mxu0 0
    %364 = vmatprep.subr.bf16.mxu0 0
    %365 = vmatpush2.bf16.msra.mxu0 0
    %366 = vmatprep.subr.bf16.mxu0 0
    %367 = vmatpush2.bf16.msra.mxu0 0
    %368 = vmatprep.subr.bf16.mxu0 0
    %369 = vmatpush2.bf16.msra.mxu0 0
    %370 = vmatprep.subr.bf16.mxu0 0
    %371 = vmatpush2.bf16.msra.mxu0 0
    %372 = vmatprep.subr.bf16.mxu0 0
    %373 = vmatpush2.bf16.msra.mxu0 0
    %374 = vmatprep.subr.bf16.mxu0 0
    %375 = vmatpush2.bf16.msra.mxu0 0
    %376 = vmatprep.subr.bf16.mxu0 0
    %377 = vmatpush2.bf16.msra.mxu0 0
    %378 = vmatprep.mubr.bf16.mxu0 0
    %379 = vmatmul.mubr.bf16.gmra.mxu0 %v344
    %v380 = vpop.f32.mrf.mxu0
    %v381 = vadd.f32 %v335, %v380
    %v382 = vpop.f32.mrf.mxu0
    %v383 = vpop.f32.mrf.mxu0
    %v384 = vadd.f32 %v335, %v383
    %v385 = vpop.f32.mrf.mxu0
    %386 = vdwg.mxu0
    %v387 = vmax.f32 %v381, 0.0
    %v388 = vmax.f32 %v384, 0.0
    %v389 = vpack.c.bf16 %v388, %v387
    %s390 = scalar_lea.vmem [#allocation8], 64
    %v391 = vld [vmem:[%s390] sm:$0xf]
    %v392 = vld [vmem:[%s390 + $0x4] sm:$0xf]
    %v393 = vld [vmem:[%s390 + $0x8] sm:$0xf]
    %v394 = vld [vmem:[%s390 + $0xc] sm:$0xf]
    %v395 = vld [vmem:[%s390 + $0x10] sm:$0xf]
    %v396 = vld [vmem:[%s390 + $0x14] sm:$0xf]
    %v397 = vld [vmem:[%s390 + $0x18] sm:$0xf]
    %v398 = vld [vmem:[%s390 + $0x1c] sm:$0xf]
    %v399 = vld [vmem:[%s390 + $0x20] sm:$0xf]
    %v400 = vld [vmem:[%s390 + $0x24] sm:$0xf]
    %v401 = vld [vmem:[%s390 + $0x28] sm:$0xf]
    %v402 = vld [vmem:[%s390 + $0x2c] sm:$0xf]
    %v403 = vld [vmem:[%s390 + $0x30] sm:$0xf]
    %v404 = vld [vmem:[%s390 + $0x34] sm:$0xf]
    %v405 = vld [vmem:[%s390 + $0x38] sm:$0xf]
    %v406 = vld [vmem:[%s390 + $0x3c] sm:$0xf]
    %v423 = vunpack.c.l.b16 %v391
    %v424 = vunpack.c.l.b16 %v392
    %v425 = vunpack.c.l.b16 %v393
    %v426 = vunpack.c.l.b16 %v394
    %v427 = vunpack.c.l.b16 %v395
    %v428 = vunpack.c.l.b16 %v396
    %v429 = vunpack.c.l.b16 %v397
    %v430 = vunpack.c.l.b16 %v398
    %v431 = vunpack.c.l.b16 %v399
    %v432 = vunpack.c.l.b16 %v400
    %v433 = vunpack.c.l.b16 %v401
    %v434 = vunpack.c.l.b16 %v402
    %v435 = vunpack.c.l.b16 %v403
    %v436 = vunpack.c.l.b16 %v404
    %v437 = vunpack.c.l.b16 %v405
    %v438 = vunpack.c.l.b16 %v406
    %v439 = vpack.c.b16 %v424, %v423
    %v440 = vpack.c.b16 %v426, %v425
    %v441 = vpack.c.b16 %v428, %v427
    %v442 = vpack.c.b16 %v430, %v429
    %v443 = vpack.c.b16 %v432, %v431
    %v444 = vpack.c.b16 %v434, %v433
    %v445 = vpack.c.b16 %v436, %v435
    %v446 = vpack.c.b16 %v438, %v437
    %455 = vmatprep.subr.bf16.mxu0 0
    %456 = vmatpush1.bf16.msra.mxu0 %v446
    %457 = vmatprep.subr.bf16.mxu0 0
    %458 = vmatpush1.bf16.msra.mxu0 %v445
    %459 = vmatprep.subr.bf16.mxu0 0
    %460 = vmatpush1.bf16.msra.mxu0 %v444
    %461 = vmatprep.subr.bf16.mxu0 0
    %462 = vmatpush1.bf16.msra.mxu0 %v443
    %463 = vmatprep.subr.bf16.mxu0 0
    %464 = vmatpush1.bf16.msra.mxu0 %v442
    %465 = vmatprep.subr.bf16.mxu0 0
    %466 = vmatpush1.bf16.msra.mxu0 %v441
    %467 = vmatprep.subr.bf16.mxu0 0
    %468 = vmatpush1.bf16.msra.mxu0 %v440
    %469 = vmatprep.subr.bf16.mxu0 0
    %470 = vmatpush1.bf16.msra.mxu0 %v439
    %471 = vmatprep.subr.bf16.mxu0 0
    %472 = vmatpush2.bf16.msra.mxu0 0
    %473 = vmatprep.subr.bf16.mxu0 0
    %474 = vmatpush2.bf16.msra.mxu0 0
    %475 = vmatprep.subr.bf16.mxu0 0
    %476 = vmatpush2.bf16.msra.mxu0 0
    %477 = vmatprep.subr.bf16.mxu0 0
    %478 = vmatpush2.bf16.msra.mxu0 0
    %479 = vmatprep.subr.bf16.mxu0 0
    %480 = vmatpush2.bf16.msra.mxu0 0
    %481 = vmatprep.subr.bf16.mxu0 0
    %482 = vmatpush2.bf16.msra.mxu0 0
    %483 = vmatprep.subr.bf16.mxu0 0
    %484 = vmatpush2.bf16.msra.mxu0 0
    %485 = vmatprep.subr.bf16.mxu0 0
    %486 = vmatpush2.bf16.msra.mxu0 0
    %487 = vmatprep.mubr.bf16.mxu0 0
    %488 = vmatmul.mubr.bf16.gmra.mxu0 %v389
    %v489 = vpop.f32.mrf.mxu0
    %v490 = vadd.f32 0.0, %v489
    %v491 = vpop.f32.mrf.mxu0
    %v492 = vpop.f32.mrf.mxu0
    %v493 = vadd.f32 0.0, %v492
    %v494 = vpop.f32.mrf.mxu0
    %495 = vdwg.mxu0
    %v496 = vpack.c.bf16 %v493, %v490
    %s497 = scalar_lea.vmem %s5, 1
    %v498 = vld [vmem:[%s497] sm:$0x1]
    %v500 = vlaneseq
    %v501 = vshrl.u32 %v500, 7
    %v502 = vsub.s32 0, %v501
    %v503 = vrot.slane %v498, %v502
    %505 = vmatprep.subr.bf16.mxu0 0
    %506 = vmatpush1.bf16.msra.mxu0 0
    %507 = vmatprep.subr.bf16.mxu0 0
    %508 = vmatpush1.bf16.msra.mxu0 0
    %509 = vmatprep.subr.bf16.mxu0 0
    %510 = vmatpush1.bf16.msra.mxu0 0
    %511 = vmatprep.subr.bf16.mxu0 0
    %512 = vmatpush1.bf16.msra.mxu0 0
    %513 = vmatprep.subr.bf16.mxu0 0
    %514 = vmatpush1.bf16.msra.mxu0 0
    %515 = vmatprep.subr.bf16.mxu0 0
    %516 = vmatpush1.bf16.msra.mxu0 0
    %517 = vmatprep.subr.bf16.mxu0 0
    %518 = vmatpush1.bf16.msra.mxu0 0
    %519 = vmatprep.subr.bf16.mxu0 0
    %520 = vmatpush1.bf16.msra.mxu0 %v496
    %521 = vmatprep.subr.bf16.mxu0 0
    %522 = vmatpush2.bf16.msra.mxu0 0
    %523 = vmatprep.subr.bf16.mxu0 0
    %524 = vmatpush2.bf16.msra.mxu0 0
    %525 = vmatprep.subr.bf16.mxu0 0
    %526 = vmatpush2.bf16.msra.mxu0 0
    %527 = vmatprep.subr.bf16.mxu0 0
    %528 = vmatpush2.bf16.msra.mxu0 0
    %529 = vmatprep.subr.bf16.mxu0 0
    %530 = vmatpush2.bf16.msra.mxu0 0
    %531 = vmatprep.subr.bf16.mxu0 0
    %532 = vmatpush2.bf16.msra.mxu0 0
    %533 = vmatprep.subr.bf16.mxu0 0
    %534 = vmatpush2.bf16.msra.mxu0 0
    %535 = vmatprep.subr.bf16.mxu0 0
    %536 = vmatpush2.bf16.msra.mxu0 0
    %537 = vmatprep.mubr.bf16.mxu0 0
    %538 = vmatmul.mubr.bf16.gmra.mxu0 %v344
    %v539 = vpop.f32.mrf.mxu0
    %v540 = vadd.f32 %v503, %v539
    %v541 = vpop.f32.mrf.mxu0
    %v542 = vpop.f32.mrf.mxu0
    %v543 = vadd.f32 %v503, %v542
    %v544 = vpop.f32.mrf.mxu0
    %545 = vdwg.mxu0
    %v546 = vmax.f32 %v540, 0.0
    %v547 = vmax.f32 %v543, 0.0
    %v548 = vpack.c.bf16 %v547, %v546
    %v549 = vld [vmem:[#allocation10] sm:$0xf]
    %v550 = vld [vmem:[#allocation10 + $0x4] sm:$0xf]
    %v551 = vld [vmem:[#allocation10 + $0x8] sm:$0xf]
    %v552 = vld [vmem:[#allocation10 + $0xc] sm:$0xf]
    %v553 = vld [vmem:[#allocation10 + $0x10] sm:$0xf]
    %v554 = vld [vmem:[#allocation10 + $0x14] sm:$0xf]
    %v555 = vld [vmem:[#allocation10 + $0x18] sm:$0xf]
    %v556 = vld [vmem:[#allocation10 + $0x1c] sm:$0xf]
    %v557 = vld [vmem:[#allocation10 + $0x20] sm:$0xf]
    %v558 = vld [vmem:[#allocation10 + $0x24] sm:$0xf]
    %v559 = vld [vmem:[#allocation10 + $0x28] sm:$0xf]
    %v560 = vld [vmem:[#allocation10 + $0x2c] sm:$0xf]
    %v561 = vld [vmem:[#allocation10 + $0x30] sm:$0xf]
    %v562 = vld [vmem:[#allocation10 + $0x34] sm:$0xf]
    %v563 = vld [vmem:[#allocation10 + $0x38] sm:$0xf]
    %v564 = vld [vmem:[#allocation10 + $0x3c] sm:$0xf]
    %v565 = vld [vmem:[%s7] sm:$0x1]
    %v567 = vlaneseq
    %v568 = vshrl.u32 %v567, 7
    %v569 = vsub.s32 0, %v568
    %v570 = vrot.slane %v565, %v569
    %v588 = vunpack.c.l.b16 %v549
    %v589 = vunpack.c.l.b16 %v550
    %v590 = vunpack.c.l.b16 %v551
    %v591 = vunpack.c.l.b16 %v552
    %v592 = vunpack.c.l.b16 %v553
    %v593 = vunpack.c.l.b16 %v554
    %v594 = vunpack.c.l.b16 %v555
    %v595 = vunpack.c.l.b16 %v556
    %v596 = vunpack.c.l.b16 %v557
    %v597 = vunpack.c.l.b16 %v558
    %v598 = vunpack.c.l.b16 %v559
    %v599 = vunpack.c.l.b16 %v560
    %v600 = vunpack.c.l.b16 %v561
    %v601 = vunpack.c.l.b16 %v562
    %v602 = vunpack.c.l.b16 %v563
    %v603 = vunpack.c.l.b16 %v564
    %v604 = vpack.c.b16 %v589, %v588
    %v605 = vpack.c.b16 %v591, %v590
    %v606 = vpack.c.b16 %v593, %v592
    %v607 = vpack.c.b16 %v595, %v594
    %v608 = vpack.c.b16 %v597, %v596
    %v609 = vpack.c.b16 %v599, %v598
    %v610 = vpack.c.b16 %v601, %v600
    %v611 = vpack.c.b16 %v603, %v602
    %620 = vmatprep.subr.bf16.mxu0 0
    %621 = vmatpush1.bf16.msra.mxu0 %v611
    %622 = vmatprep.subr.bf16.mxu0 0
    %623 = vmatpush1.bf16.msra.mxu0 %v610
    %624 = vmatprep.subr.bf16.mxu0 0
    %625 = vmatpush1.bf16.msra.mxu0 %v609
    %626 = vmatprep.subr.bf16.mxu0 0
    %627 = vmatpush1.bf16.msra.mxu0 %v608
    %628 = vmatprep.subr.bf16.mxu0 0
    %629 = vmatpush1.bf16.msra.mxu0 %v607
    %630 = vmatprep.subr.bf16.mxu0 0
    %631 = vmatpush1.bf16.msra.mxu0 %v606
    %632 = vmatprep.subr.bf16.mxu0 0
    %633 = vmatpush1.bf16.msra.mxu0 %v605
    %634 = vmatprep.subr.bf16.mxu0 0
    %635 = vmatpush1.bf16.msra.mxu0 %v604
    %636 = vmatprep.subr.bf16.mxu0 0
    %637 = vmatpush2.bf16.msra.mxu0 0
    %638 = vmatprep.subr.bf16.mxu0 0
    %639 = vmatpush2.bf16.msra.mxu0 0
    %640 = vmatprep.subr.bf16.mxu0 0
    %641 = vmatpush2.bf16.msra.mxu0 0
    %642 = vmatprep.subr.bf16.mxu0 0
    %643 = vmatpush2.bf16.msra.mxu0 0
    %644 = vmatprep.subr.bf16.mxu0 0
    %645 = vmatpush2.bf16.msra.mxu0 0
    %646 = vmatprep.subr.bf16.mxu0 0
    %647 = vmatpush2.bf16.msra.mxu0 0
    %648 = vmatprep.subr.bf16.mxu0 0
    %649 = vmatpush2.bf16.msra.mxu0 0
    %650 = vmatprep.subr.bf16.mxu0 0
    %651 = vmatpush2.bf16.msra.mxu0 0
    %652 = vmatprep.mubr.bf16.mxu0 0
    %653 = vmatmul.mubr.bf16.gmra.mxu0 %v548
    %v654 = vpop.f32.mrf.mxu0
    %v655 = vadd.f32 %v570, %v654
    %v656 = vpop.f32.mrf.mxu0
    %v657 = vpop.f32.mrf.mxu0
    %v658 = vadd.f32 %v570, %v657
    %v659 = vpop.f32.mrf.mxu0
    %660 = vdwg.mxu0
    %661 = vst [vmem:[#allocation11] sm:$0xff] %v655
    %662 = vst [vmem:[#allocation11 + $0x8] sm:$0xff] %v658
    // Predicated region
    $region54: #{tpu_custom_call.1} parent=1 // pred_check
      _
    $region55: #{tpu_custom_call.1} parent=1 // pred_check_branch
      %664 = sbr.rel (0) target = $region57
    $region56: #{tpu_custom_call.1} parent=1 // pred_region
      %s666 = ssub.s32 256, 256
      %667 = vsyncadd [#allocation4], %s666
      %s668 = sshll.u32 [#allocation11], 4
      %s669 = int_to_ptr.vmem [resolvable:$true] %s668
      %674 = dma.vmem_to_hbm [thread:$0]  %s669, 256, %s8, [#allocation4], 128, 128, 8
    $region57: #{tpu_custom_call.1} parent=1 // pred_fallthru
      _
    // Predicated region
    $region58: #{tpu_custom_call.1} parent=1 // pred_check
      _
    $region59: #{tpu_custom_call.1} parent=1 // pred_check_branch
      %676 = sbr.rel (0) target = $region61
    $region60: #{tpu_custom_call.1} parent=1 // pred_region
      %677 = dma.done [#allocation4], 256
    $region61: #{tpu_custom_call.1} parent=1 // pred_fallthru
      _
    %678 = vsyncpa [#allocation3], 1
    %679 = vsyncpa [#allocation6], 1
    %680 = vsyncpa [#allocation9], 1
    %681 = vsyncpa [#allocation4], 1

</llo_original>
